<compile_context>
chip_gen: v5e
topology: v5e:2x2
jax: 0.10.0
libtpu: 0.0.40
codegen_flags: <defaults>
</compile_context>

<pallas_src>
import jax
import jax.numpy as jnp
from jax.experimental import pallas as pl
from jax.experimental.pallas import tpu as pltpu

NPAD = 128   # lane-padded logits width  (>= number of classes, multiple of 128)
KPAD = 128   # lane-padded contraction dim for the fused conv matmul (9*C_in + 1 bias col)


def fused_densenet_head_kernel(p_ref, w_ref, cw_ref, cb_ref, o_ref):
    """One batch *block* per grid step.

    p_ref : (B_blk, H*W, KPAD)  bf16  im2col patches (+ constant-1 bias column, K zero-padded)
    w_ref : (KPAD, C_feat)      bf16  conv weight rows (dy,dx,c_in), conv bias as last live row
    cw_ref: (C_feat, NPAD)      f32   classifier weight^T, pre-scaled by 1/(H*W), lane-padded
    cb_ref: (1, NPAD)           f32   classifier bias, lane-padded
    o_ref : (B_blk, 1, NPAD)    f32   lane-padded logits
    """
    b_blk, hw, k = p_ref.shape
    c_feat = w_ref.shape[1]

    # One K-dense MXU matmul does the whole 3x3 conv + bias for every pixel of the block.
    # (Collapsing (B_blk, HW) -> B_blk*HW is layout-free: HW is a multiple of 8, lane dim fixed.)
    lhs = p_ref[...].reshape(b_blk * hw, k)                       # bf16, no up-cast
    acc = jnp.dot(lhs, w_ref[...], preferred_element_type=jnp.float32)

    acc = jnp.maximum(acc, 0.0)                                   # F.relu, f32
    pooled = jnp.sum(acc.reshape(b_blk, hw, c_feat), axis=1)      # sum-pool; 1/(H*W) in cw_ref

    logits = jnp.dot(pooled, cw_ref[...], preferred_element_type=jnp.float32) + cb_ref[...]
    o_ref[...] = logits[:, None, :].astype(o_ref.dtype)           # lane-dense store


def modified_densenet_forward(x, params, num_batch_blocks=1):
    """num_batch_blocks=1: whole batch per step (best on 1-TC v5e/v6e and for small B).
       num_batch_blocks=2: half-batch per step, sharded across v7x's two TensorCores."""
    conv_w, conv_b, cls_w, cls_b = params          # OIHW conv weight, (2, C_feat) classifier
    B, c_in, H, W = x.shape
    c_feat = conv_w.shape[0]
    n_cls = cls_w.shape[0]
    HW = H * W
    K = 9 * c_in
    assert K + 1 <= KPAD
    assert B % num_batch_blocks == 0
    b_blk = B // num_batch_blocks

    # --- host-side im2col (tiny here; keeps the kernel free of unaligned slice relayouts) ---
    x_nhwc = jnp.transpose(x, (0, 2, 3, 1))
    x_pad = jnp.pad(x_nhwc, ((0, 0), (1, 1), (1, 1), (0, 0)))        # explicit zero halo
    taps = [x_pad[:, dy:dy + H, dx:dx + W, :] for dy in range(3) for dx in range(3)]
    patches = jnp.stack(taps, axis=3).reshape(B, HW, K)              # (B, HW, 9*C_in)
    ones_col = jnp.ones((B, HW, 1), patches.dtype)                   # constant-1 bias column
    patches = jnp.concatenate([patches, ones_col], axis=-1)
    patches = jnp.pad(patches, ((0, 0), (0, 0), (0, KPAD - K - 1))).astype(jnp.bfloat16)

    # --- conv weight OIHW -> (dy,dx,c_in) rows, bias appended as a row, K-padded, bf16 ---
    w = jnp.transpose(conv_w, (2, 3, 1, 0)).reshape(K, c_feat)
    w = jnp.concatenate([w, conv_b.reshape(1, c_feat)], axis=0)
    w = jnp.pad(w, ((0, KPAD - K - 1), (0, 0))).astype(jnp.bfloat16)

    # --- classifier: transpose, fold the 1/(H*W) pooling scale, lane-pad to NPAD ---
    cw = cls_w.T.astype(jnp.float32) * (1.0 / HW)                    # (C_feat, n_cls)
    cw_pad = jnp.pad(cw, ((0, 0), (0, NPAD - n_cls)))
    cb_pad = jnp.pad(cls_b.reshape(1, n_cls).astype(jnp.float32),
                     ((0, 0), (0, NPAD - n_cls)))

    flops = B * (2 * HW * KPAD * c_feat + 2 * c_feat * NPAD)
    bytes_accessed = (patches.size * 2 + w.size * 2
                      + (cw_pad.size + cb_pad.size + B * NPAD) * 4)

    out = pl.pallas_call(
        fused_densenet_head_kernel,
        out_shape=jax.ShapeDtypeStruct((B, 1, NPAD), jnp.float32),
        grid=(num_batch_blocks,),
        in_specs=[
            pl.BlockSpec((b_blk, HW, KPAD), lambda b: (b, 0, 0)),
            pl.BlockSpec((KPAD, c_feat), lambda b: (0, 0)),    # VMEM-resident weights
            pl.BlockSpec((c_feat, NPAD), lambda b: (0, 0)),
            pl.BlockSpec((1, NPAD), lambda b: (0, 0)),
        ],
        out_specs=pl.BlockSpec((b_blk, 1, NPAD), lambda b: (b, 0, 0)),
        compiler_params=pltpu.CompilerParams(
            dimension_semantics=("parallel",),                 # v7x: shard batch blocks over TCs
            vmem_limit_bytes=28 * 1024 * 1024,                 # headroom within v7x's 64 MiB
        ),
        cost_estimate=pl.CostEstimate(
            flops=flops, transcendentals=0, bytes_accessed=bytes_accessed),
    )(patches, w, cw_pad, cb_pad)

    return out.reshape(B, NPAD)[:, :n_cls]                     # slice lane padding away


def make_params(key, c_in=4, c_feat=128):
    k1, k2, k3, k4 = jax.random.split(key, 4)
    conv_w = jax.random.normal(k1, (c_feat, c_in, 3, 3), jnp.float32) * 0.1
    conv_b = jax.random.normal(k2, (c_feat,), jnp.float32) * 0.1
    cls_w = jax.random.normal(k3, (2, c_feat), jnp.float32) * 0.1    # nn.Linear(in_features, 2)
    cls_b = jax.random.normal(k4, (2,), jnp.float32) * 0.1
    return conv_w, conv_b, cls_w, cls_b


if __name__ == "__main__":
    key = jax.random.PRNGKey(0)
    kx, kp = jax.random.split(key)
    x = jax.random.normal(kx, (2, 4, 16, 16), jnp.float32)   # NCHW, like the PyTorch model
    params = make_params(kp, c_in=4, c_feat=128)             # lane-aligned feature channels

    fwd = jax.jit(modified_densenet_forward)
    logits = fwd(x, params)
    jax.block_until_ready(logits)

    # Pure-JAX reference of the same forward (same bf16 rounding of all MXU operands,
    # including the conv bias, which rides the MXU via the constant-1 im2col column).
    conv_w, conv_b, cls_w, cls_b = params
    x_bf = x.astype(jnp.bfloat16).astype(jnp.float32)
    w_bf = conv_w.astype(jnp.bfloat16).astype(jnp.float32)
    b_bf = conv_b.astype(jnp.bfloat16).astype(jnp.float32)
    ref_feat = jax.lax.conv_general_dilated(
        x_bf, w_bf, window_strides=(1, 1), padding="SAME",
        dimension_numbers=("NCHW", "OIHW", "NCHW"),
        precision=jax.lax.Precision.HIGHEST,
    ) + b_bf[None, :, None, None]
    ref = jnp.maximum(ref_feat, 0.0).mean(axis=(2, 3)) @ cls_w.T + cls_b

    assert logits.shape == (2, 2)
    assert jnp.allclose(logits, ref, atol=2e-4, rtol=2e-4), \
        float(jnp.max(jnp.abs(logits - ref)))

    print("KERNEL_OK")
</pallas_src>

<mosaic_0001>
module attributes {stable_mosaic.version = 11 : i64} {
  func.func @fused_densenet_head_kernel(%arg0: i32, %arg1: memref<2x256x128xbf16, #tpu.memory_space<vmem>>, %arg2: memref<128x128xbf16, #tpu.memory_space<vmem>>, %arg3: memref<128x128xf32, #tpu.memory_space<vmem>>, %arg4: memref<1x128xf32, #tpu.memory_space<vmem>>, %arg5: memref<2x1x128xf32, #tpu.memory_space<vmem>>) attributes {dimension_semantics = [#tpu.dimension_semantics<parallel>], iteration_bounds = array<i64: 1>, scalar_prefetch = 0 : i64, scratch_operands = 0 : i64, tpu.core_type = #tpu.core_type<tc>, window_params = [{transform_indices = @transform_0, window_bounds = array<i64: 2, 256, 128>}, {pipeline_mode = #tpu.pipeline_mode<synchronous>, transform_indices = @transform_1, window_bounds = array<i64: 128, 128>}, {pipeline_mode = #tpu.pipeline_mode<synchronous>, transform_indices = @transform_2, window_bounds = array<i64: 128, 128>}, {pipeline_mode = #tpu.pipeline_mode<synchronous>, transform_indices = @transform_3, window_bounds = array<i64: 1, 128>}, {transform_indices = @transform_4, window_bounds = array<i64: 2, 1, 128>}]} {
    %c0 = arith.constant 0 : index
    %c0_0 = arith.constant 0 : index
    %c0_1 = arith.constant 0 : index
    %0 = vector.load %arg1[%c0, %c0_0, %c0_1] : memref<2x256x128xbf16, #tpu.memory_space<vmem>>, vector<2x256x128xbf16>
    %1 = vector.shape_cast %0 : vector<2x256x128xbf16> to vector<512x128xbf16>
    %c0_2 = arith.constant 0 : index
    %c0_3 = arith.constant 0 : index
    %2 = vector.load %arg2[%c0_2, %c0_3] : memref<128x128xbf16, #tpu.memory_space<vmem>>, vector<128x128xbf16>
    %cst = arith.constant dense<0.000000e+00> : vector<512x128xf32>
    %3 = tpu.matmul %1, %2, %cst {dimension_numbers = #tpu.dot_dimension_numbers<[1], [0], [0], [1], [0, 0, 1, 1], [], []>} : vector<512x128xbf16>, vector<128x128xbf16>, vector<512x128xf32> -> vector<512x128xf32>
    %cst_4 = arith.constant 0.000000e+00 : f32
    %4 = vector.broadcast %cst_4 : f32 to vector<512x128xf32>
    %5 = arith.maximumf %3, %4 : vector<512x128xf32>
    %6 = vector.shape_cast %5 : vector<512x128xf32> to vector<2x256x128xf32>
    %cst_5 = arith.constant dense<0.000000e+00> : vector<2x128xf32>
    %7 = vector.multi_reduction <add>, %6, %cst_5 [1] : vector<2x256x128xf32> to vector<2x128xf32>
    %c0_6 = arith.constant 0 : index
    %c0_7 = arith.constant 0 : index
    %8 = vector.load %arg3[%c0_6, %c0_7] : memref<128x128xf32, #tpu.memory_space<vmem>>, vector<128x128xf32>
    %cst_8 = arith.constant dense<0.000000e+00> : vector<2x128xf32>
    %9 = tpu.matmul %7, %8, %cst_8 {dimension_numbers = #tpu.dot_dimension_numbers<[1], [0], [0], [1], [0, 0, 1, 1], [], []>} : vector<2x128xf32>, vector<128x128xf32>, vector<2x128xf32> -> vector<2x128xf32>
    %c0_9 = arith.constant 0 : index
    %c0_10 = arith.constant 0 : index
    %10 = vector.load %arg4[%c0_9, %c0_10] : memref<1x128xf32, #tpu.memory_space<vmem>>, vector<1x128xf32>
    %11 = vector.broadcast %10 : vector<1x128xf32> to vector<2x128xf32>
    %12 = arith.addf %9, %11 : vector<2x128xf32>
    %13 = vector.shape_cast %12 : vector<2x128xf32> to vector<2x1x128xf32>
    %c0_11 = arith.constant 0 : index
    %c0_12 = arith.constant 0 : index
    %c0_13 = arith.constant 0 : index
    %14 = vector.load %arg5[%c0_11, %c0_12, %c0_13] : memref<2x1x128xf32, #tpu.memory_space<vmem>>, vector<2x1x128xf32>
    tpu.vector_store %arg5[%c0_11, %c0_12, %c0_13], %13 {strides = array<i32>} : memref<2x1x128xf32, #tpu.memory_space<vmem>>, vector<2x1x128xf32>,
    return
  }
  func.func @transform_0(%arg0: i32) -> (i32, i32, i32) {
    %c0_i32 = arith.constant 0 : i32
    %c0_i32_0 = arith.constant 0 : i32
    %c0_i32_1 = arith.constant 0 : i32
    return %arg0, %c0_i32, %c0_i32_0 : i32, i32, i32
  }
  func.func @transform_1(%arg0: i32) -> (i32, i32) {
    %c0_i32 = arith.constant 0 : i32
    %c0_i32_0 = arith.constant 0 : i32
    %c0_i32_1 = arith.constant 0 : i32
    return %c0_i32, %c0_i32_0 : i32, i32
  }
  func.func @transform_2(%arg0: i32) -> (i32, i32) {
    %c0_i32 = arith.constant 0 : i32
    %c0_i32_0 = arith.constant 0 : i32
    %c0_i32_1 = arith.constant 0 : i32
    return %c0_i32, %c0_i32_0 : i32, i32
  }
  func.func @transform_3(%arg0: i32) -> (i32, i32) {
    %c0_i32 = arith.constant 0 : i32
    %c0_i32_0 = arith.constant 0 : i32
    %c0_i32_1 = arith.constant 0 : i32
    return %c0_i32, %c0_i32_0 : i32, i32
  }
  func.func @transform_4(%arg0: i32) -> (i32, i32, i32) {
    %c0_i32 = arith.constant 0 : i32
    %c0_i32_0 = arith.constant 0 : i32
    %c0_i32_1 = arith.constant 0 : i32
    return %arg0, %c0_i32, %c0_i32_0 : i32, i32, i32
  }
}

</mosaic_0001>

<llo_original>
// kernel: modified_densenet_forward.1
$region0: #{modified_densenet_forward.1}
  #allocation0 [shape = 'u32[]', space=smem, size = 0x4, offset = 0x4, fixed_abs, tag = 'smem constant byte address 0x4 - core index']
  #allocation1 [shape = 'u32[72,128]{1,0:T(1,128)}', space=vmem, size = 0x9000, scoped, tag = 'internal scratch']
  %s0 = inlined_call_operand.vmem [shape: bf16[2,256,128], index: 0, kind: input, shape index: {}]
  %s1 = inlined_call_operand.vmem [shape: bf16[128,128], index: 1, kind: input, shape index: {}]
  %s2 = inlined_call_operand.vmem [shape: f32[128,128], index: 2, kind: input, shape index: {}]
  %s3 = inlined_call_operand.vmem [shape: f32[1,128], index: 3, kind: input, shape index: {}]
  %s4 = inlined_call_operand.hbm [shape: f32[2,1,128], index: 4, kind: output, shape index: {}]
  %s5 = sld [smem:[#allocation0]]
  $region26: #{modified_densenet_forward.1} parent=0
    _
  %s7 = ssub.s32 1, %s5
  %s8 = scalar_select 0, %s7, %s5
  $region1: #{modified_densenet_forward.1} parent=0
    #allocation2 [shape = 'u8[1024]{0}', space=vmem, size = 0x400, scoped, tag = 'output window, operand 0, single buffered']
    #allocation3 [shape = 's32[1]{0}', space=sflag, size = 0x4, scoped, tag = 'scoped memory for modified_densenet_forward.1']
    %9 = vsyncpa [#allocation3], 0
    // Predicated region
    $region2: #{modified_densenet_forward.1} parent=1 // pred_check
      _
    $region3: #{modified_densenet_forward.1} parent=1 // pred_check_branch
      %11 = sbr.rel (0) target = $region5
    $region4: #{modified_densenet_forward.1} parent=1 // pred_region
      _
    $region5: #{modified_densenet_forward.1} parent=1 // pred_fallthru
      _
    // Predicated region
    $region6: #{modified_densenet_forward.1} parent=1 // pred_check
      _
    $region7: #{modified_densenet_forward.1} parent=1 // pred_check_branch
      %13 = sbr.rel (0) target = $region9
    $region8: #{modified_densenet_forward.1} parent=1 // pred_region
      _
    $region9: #{modified_densenet_forward.1} parent=1 // pred_fallthru
      _
    // Predicated region
    $region10: #{modified_densenet_forward.1} parent=1 // pred_check
      _
    $region11: #{modified_densenet_forward.1} parent=1 // pred_check_branch
      %15 = sbr.rel (0) target = $region13
    $region12: #{modified_densenet_forward.1} parent=1 // pred_region
      _
    $region13: #{modified_densenet_forward.1} parent=1 // pred_fallthru
      _
    // Predicated region
    $region14: #{modified_densenet_forward.1} parent=1 // pred_check
      _
    $region15: #{modified_densenet_forward.1} parent=1 // pred_check_branch
      %17 = sbr.rel (0) target = $region17
    $region16: #{modified_densenet_forward.1} parent=1 // pred_region
      _
    $region17: #{modified_densenet_forward.1} parent=1 // pred_fallthru
      _
    %v18 = vld [vmem:[%s0] sm:$0xf]
    %v19 = vld [vmem:[%s0 + $0x4] sm:$0xf]
    %v20 = vld [vmem:[%s0 + $0x8] sm:$0xf]
    %v21 = vld [vmem:[%s0 + $0xc] sm:$0xf]
    %v22 = vld [vmem:[%s0 + $0x10] sm:$0xf]
    %v23 = vld [vmem:[%s0 + $0x14] sm:$0xf]
    %v24 = vld [vmem:[%s0 + $0x18] sm:$0xf]
    %v25 = vld [vmem:[%s0 + $0x1c] sm:$0xf]
    %v26 = vld [vmem:[%s0 + $0x20] sm:$0xf]
    %v27 = vld [vmem:[%s0 + $0x24] sm:$0xf]
    %v28 = vld [vmem:[%s0 + $0x28] sm:$0xf]
    %v29 = vld [vmem:[%s0 + $0x2c] sm:$0xf]
    %v30 = vld [vmem:[%s0 + $0x30] sm:$0xf]
    %v31 = vld [vmem:[%s0 + $0x34] sm:$0xf]
    %v32 = vld [vmem:[%s0 + $0x38] sm:$0xf]
    %v33 = vld [vmem:[%s0 + $0x3c] sm:$0xf]
    %v34 = vld [vmem:[%s0 + $0x40] sm:$0xf]
    %v35 = vld [vmem:[%s0 + $0x44] sm:$0xf]
    %v36 = vld [vmem:[%s0 + $0x48] sm:$0xf]
    %v37 = vld [vmem:[%s0 + $0x4c] sm:$0xf]
    %v38 = vld [vmem:[%s0 + $0x50] sm:$0xf]
    %v39 = vld [vmem:[%s0 + $0x54] sm:$0xf]
    %v40 = vld [vmem:[%s0 + $0x58] sm:$0xf]
    %v41 = vld [vmem:[%s0 + $0x5c] sm:$0xf]
    %v42 = vld [vmem:[%s0 + $0x60] sm:$0xf]
    %v43 = vld [vmem:[%s0 + $0x64] sm:$0xf]
    %v44 = vld [vmem:[%s0 + $0x68] sm:$0xf]
    %v45 = vld [vmem:[%s0 + $0x6c] sm:$0xf]
    %v46 = vld [vmem:[%s0 + $0x70] sm:$0xf]
    %v47 = vld [vmem:[%s0 + $0x74] sm:$0xf]
    %v48 = vld [vmem:[%s0 + $0x78] sm:$0xf]
    %v49 = vld [vmem:[%s0 + $0x7c] sm:$0xf]
    %v50 = vld [vmem:[%s0 + $0x80] sm:$0xf]
    %v51 = vld [vmem:[%s0 + $0x84] sm:$0xf]
    %v52 = vld [vmem:[%s0 + $0x88] sm:$0xf]
    %v53 = vld [vmem:[%s0 + $0x8c] sm:$0xf]
    %v54 = vld [vmem:[%s0 + $0x90] sm:$0xf]
    %v55 = vld [vmem:[%s0 + $0x94] sm:$0xf]
    %v56 = vld [vmem:[%s0 + $0x98] sm:$0xf]
    %v57 = vld [vmem:[%s0 + $0x9c] sm:$0xf]
    %v58 = vld [vmem:[%s0 + $0xa0] sm:$0xf]
    %v59 = vld [vmem:[%s0 + $0xa4] sm:$0xf]
    %v60 = vld [vmem:[%s0 + $0xa8] sm:$0xf]
    %v61 = vld [vmem:[%s0 + $0xac] sm:$0xf]
    %v62 = vld [vmem:[%s0 + $0xb0] sm:$0xf]
    %v63 = vld [vmem:[%s0 + $0xb4] sm:$0xf]
    %v64 = vld [vmem:[%s0 + $0xb8] sm:$0xf]
    %v65 = vld [vmem:[%s0 + $0xbc] sm:$0xf]
    %v66 = vld [vmem:[%s0 + $0xc0] sm:$0xf]
    %v67 = vld [vmem:[%s0 + $0xc4] sm:$0xf]
    %v68 = vld [vmem:[%s0 + $0xc8] sm:$0xf]
    %v69 = vld [vmem:[%s0 + $0xcc] sm:$0xf]
    %v70 = vld [vmem:[%s0 + $0xd0] sm:$0xf]
    %v71 = vld [vmem:[%s0 + $0xd4] sm:$0xf]
    %v72 = vld [vmem:[%s0 + $0xd8] sm:$0xf]
    %v73 = vld [vmem:[%s0 + $0xdc] sm:$0xf]
    %v74 = vld [vmem:[%s0 + $0xe0] sm:$0xf]
    %v75 = vld [vmem:[%s0 + $0xe4] sm:$0xf]
    %v76 = vld [vmem:[%s0 + $0xe8] sm:$0xf]
    %v77 = vld [vmem:[%s0 + $0xec] sm:$0xf]
    %v78 = vld [vmem:[%s0 + $0xf0] sm:$0xf]
    %v79 = vld [vmem:[%s0 + $0xf4] sm:$0xf]
    %v80 = vld [vmem:[%s0 + $0xf8] sm:$0xf]
    %v81 = vld [vmem:[%s0 + $0xfc] sm:$0xf]
    %v82 = vld [vmem:[%s1] sm:$0xf]
    %v83 = vld [vmem:[%s1 + $0x4] sm:$0xf]
    %v84 = vld [vmem:[%s1 + $0x8] sm:$0xf]
    %v85 = vld [vmem:[%s1 + $0xc] sm:$0xf]
    %v86 = vld [vmem:[%s1 + $0x10] sm:$0xf]
    %v87 = vld [vmem:[%s1 + $0x14] sm:$0xf]
    %v88 = vld [vmem:[%s1 + $0x18] sm:$0xf]
    %v89 = vld [vmem:[%s1 + $0x1c] sm:$0xf]
    %v90 = vld [vmem:[%s1 + $0x20] sm:$0xf]
    %v91 = vld [vmem:[%s1 + $0x24] sm:$0xf]
    %v92 = vld [vmem:[%s1 + $0x28] sm:$0xf]
    %v93 = vld [vmem:[%s1 + $0x2c] sm:$0xf]
    %v94 = vld [vmem:[%s1 + $0x30] sm:$0xf]
    %v95 = vld [vmem:[%s1 + $0x34] sm:$0xf]
    %v96 = vld [vmem:[%s1 + $0x38] sm:$0xf]
    %v97 = vld [vmem:[%s1 + $0x3c] sm:$0xf]
    %v162 = vunpack.c.l.b16 %v18
    %v163 = vunpack.c.l.b16 %v19
    %v164 = vunpack.c.l.b16 %v20
    %v165 = vunpack.c.l.b16 %v21
    %v166 = vunpack.c.l.b16 %v22
    %v167 = vunpack.c.l.b16 %v23
    %v168 = vunpack.c.l.b16 %v24
    %v169 = vunpack.c.l.b16 %v25
    %v170 = vunpack.c.l.b16 %v26
    %v171 = vunpack.c.l.b16 %v27
    %v172 = vunpack.c.l.b16 %v28
    %v173 = vunpack.c.l.b16 %v29
    %v174 = vunpack.c.l.b16 %v30
    %v175 = vunpack.c.l.b16 %v31
    %v176 = vunpack.c.l.b16 %v32
    %v177 = vunpack.c.l.b16 %v33
    %v178 = vunpack.c.l.b16 %v34
    %v179 = vunpack.c.l.b16 %v35
    %v180 = vunpack.c.l.b16 %v36
    %v181 = vunpack.c.l.b16 %v37
    %v182 = vunpack.c.l.b16 %v38
    %v183 = vunpack.c.l.b16 %v39
    %v184 = vunpack.c.l.b16 %v40
    %v185 = vunpack.c.l.b16 %v41
    %v186 = vunpack.c.l.b16 %v42
    %v187 = vunpack.c.l.b16 %v43
    %v188 = vunpack.c.l.b16 %v44
    %v189 = vunpack.c.l.b16 %v45
    %v190 = vunpack.c.l.b16 %v46
    %v191 = vunpack.c.l.b16 %v47
    %v192 = vunpack.c.l.b16 %v48
    %v193 = vunpack.c.l.b16 %v49
    %v194 = vunpack.c.l.b16 %v50
    %v195 = vunpack.c.l.b16 %v51
    %v196 = vunpack.c.l.b16 %v52
    %v197 = vunpack.c.l.b16 %v53
    %v198 = vunpack.c.l.b16 %v54
    %v199 = vunpack.c.l.b16 %v55
    %v200 = vunpack.c.l.b16 %v56
    %v201 = vunpack.c.l.b16 %v57
    %v202 = vunpack.c.l.b16 %v58
    %v203 = vunpack.c.l.b16 %v59
    %v204 = vunpack.c.l.b16 %v60
    %v205 = vunpack.c.l.b16 %v61
    %v206 = vunpack.c.l.b16 %v62
    %v207 = vunpack.c.l.b16 %v63
    %v208 = vunpack.c.l.b16 %v64
    %v209 = vunpack.c.l.b16 %v65
    %v210 = vunpack.c.l.b16 %v66
    %v211 = vunpack.c.l.b16 %v67
    %v212 = vunpack.c.l.b16 %v68
    %v213 = vunpack.c.l.b16 %v69
    %v214 = vunpack.c.l.b16 %v70
    %v215 = vunpack.c.l.b16 %v71
    %v216 = vunpack.c.l.b16 %v72
    %v217 = vunpack.c.l.b16 %v73
    %v218 = vunpack.c.l.b16 %v74
    %v219 = vunpack.c.l.b16 %v75
    %v220 = vunpack.c.l.b16 %v76
    %v221 = vunpack.c.l.b16 %v77
    %v222 = vunpack.c.l.b16 %v78
    %v223 = vunpack.c.l.b16 %v79
    %v224 = vunpack.c.l.b16 %v80
    %v225 = vunpack.c.l.b16 %v81
    %v226 = vpack.c.b16 %v163, %v162
    %v227 = vpack.c.b16 %v165, %v164
    %v228 = vpack.c.b16 %v167, %v166
    %v229 = vpack.c.b16 %v169, %v168
    %v230 = vpack.c.b16 %v171, %v170
    %v231 = vpack.c.b16 %v173, %v172
    %v232 = vpack.c.b16 %v175, %v174
    %v233 = vpack.c.b16 %v177, %v176
    %v234 = vpack.c.b16 %v179, %v178
    %v235 = vpack.c.b16 %v181, %v180
    %v236 = vpack.c.b16 %v183, %v182
    %v237 = vpack.c.b16 %v185, %v184
    %v238 = vpack.c.b16 %v187, %v186
    %v239 = vpack.c.b16 %v189, %v188
    %v240 = vpack.c.b16 %v191, %v190
    %v241 = vpack.c.b16 %v193, %v192
    %v242 = vpack.c.b16 %v195, %v194
    %v243 = vpack.c.b16 %v197, %v196
    %v244 = vpack.c.b16 %v199, %v198
    %v245 = vpack.c.b16 %v201, %v200
    %v246 = vpack.c.b16 %v203, %v202
    %v247 = vpack.c.b16 %v205, %v204
    %v248 = vpack.c.b16 %v207, %v206
    %v249 = vpack.c.b16 %v209, %v208
    %v250 = vpack.c.b16 %v211, %v210
    %v251 = vpack.c.b16 %v213, %v212
    %v252 = vpack.c.b16 %v215, %v214
    %v253 = vpack.c.b16 %v217, %v216
    %v254 = vpack.c.b16 %v219, %v218
    %v255 = vpack.c.b16 %v221, %v220
    %v256 = vpack.c.b16 %v223, %v222
    %v257 = vpack.c.b16 %v225, %v224
    %v306 = vunpack.c.l.b16 %v82
    %v307 = vunpack.c.l.b16 %v83
    %v308 = vunpack.c.l.b16 %v84
    %v309 = vunpack.c.l.b16 %v85
    %v310 = vunpack.c.l.b16 %v86
    %v311 = vunpack.c.l.b16 %v87
    %v312 = vunpack.c.l.b16 %v88
    %v313 = vunpack.c.l.b16 %v89
    %v314 = vunpack.c.l.b16 %v90
    %v315 = vunpack.c.l.b16 %v91
    %v316 = vunpack.c.l.b16 %v92
    %v317 = vunpack.c.l.b16 %v93
    %v318 = vunpack.c.l.b16 %v94
    %v319 = vunpack.c.l.b16 %v95
    %v320 = vunpack.c.l.b16 %v96
    %v321 = vunpack.c.l.b16 %v97
    %v322 = vpack.c.b16 %v307, %v306
    %v323 = vpack.c.b16 %v309, %v308
    %v324 = vpack.c.b16 %v311, %v310
    %v325 = vpack.c.b16 %v313, %v312
    %v326 = vpack.c.b16 %v315, %v314
    %v327 = vpack.c.b16 %v317, %v316
    %v328 = vpack.c.b16 %v319, %v318
    %v329 = vpack.c.b16 %v321, %v320
    %338 = vmatpush.bf16.msra.mxu0 %v329
    %339 = vmatpush.bf16.msra.mxu0 %v328
    %340 = vmatpush.bf16.msra.mxu0 %v327
    %341 = vmatpush.bf16.msra.mxu0 %v326
    %342 = vmatpush.bf16.msra.mxu0 %v325
    %343 = vmatpush.bf16.msra.mxu0 %v324
    %344 = vmatpush.bf16.msra.mxu0 %v323
    %345 = vmatpush.bf16.msra.mxu0 %v322
    %346 = vmatmul.bf16.gmra.mxu0 %v226
    %v347 = vpop.f32.mrf.mxu0
    %v348 = vadd.f32 0.0, %v347
    %v349 = vpop.f32.mrf.mxu0
    %v350 = vadd.f32 0.0, %v349
    %351 = vmatmul.bf16.gmra.mxu0 %v227
    %v352 = vpop.f32.mrf.mxu0
    %v353 = vadd.f32 0.0, %v352
    %v354 = vpop.f32.mrf.mxu0
    %v355 = vadd.f32 0.0, %v354
    %356 = vmatmul.bf16.gmra.mxu0 %v228
    %v357 = vpop.f32.mrf.mxu0
    %v358 = vadd.f32 0.0, %v357
    %v359 = vpop.f32.mrf.mxu0
    %v360 = vadd.f32 0.0, %v359
    %361 = vmatmul.bf16.gmra.mxu0 %v229
    %v362 = vpop.f32.mrf.mxu0
    %v363 = vadd.f32 0.0, %v362
    %v364 = vpop.f32.mrf.mxu0
    %v365 = vadd.f32 0.0, %v364
    %366 = vmatmul.bf16.gmra.mxu0 %v230
    %v367 = vpop.f32.mrf.mxu0
    %v368 = vadd.f32 0.0, %v367
    %v369 = vpop.f32.mrf.mxu0
    %v370 = vadd.f32 0.0, %v369
    %371 = vmatmul.bf16.gmra.mxu0 %v231
    %v372 = vpop.f32.mrf.mxu0
    %v373 = vadd.f32 0.0, %v372
    %v374 = vpop.f32.mrf.mxu0
    %v375 = vadd.f32 0.0, %v374
    %376 = vmatmul.bf16.gmra.mxu0 %v232
    %v377 = vpop.f32.mrf.mxu0
    %v378 = vadd.f32 0.0, %v377
    %v379 = vpop.f32.mrf.mxu0
    %v380 = vadd.f32 0.0, %v379
    %381 = vmatmul.bf16.gmra.mxu0 %v233
    %v382 = vpop.f32.mrf.mxu0
    %v383 = vadd.f32 0.0, %v382
    %v384 = vpop.f32.mrf.mxu0
    %v385 = vadd.f32 0.0, %v384
    %386 = vmatmul.bf16.gmra.mxu0 %v234
    %v387 = vpop.f32.mrf.mxu0
    %v388 = vadd.f32 0.0, %v387
    %v389 = vpop.f32.mrf.mxu0
    %v390 = vadd.f32 0.0, %v389
    %391 = vmatmul.bf16.gmra.mxu0 %v235
    %v392 = vpop.f32.mrf.mxu0
    %v393 = vadd.f32 0.0, %v392
    %v394 = vpop.f32.mrf.mxu0
    %v395 = vadd.f32 0.0, %v394
    %396 = vmatmul.bf16.gmra.mxu0 %v236
    %v397 = vpop.f32.mrf.mxu0
    %v398 = vadd.f32 0.0, %v397
    %v399 = vpop.f32.mrf.mxu0
    %v400 = vadd.f32 0.0, %v399
    %401 = vmatmul.bf16.gmra.mxu0 %v237
    %v402 = vpop.f32.mrf.mxu0
    %v403 = vadd.f32 0.0, %v402
    %v404 = vpop.f32.mrf.mxu0
    %v405 = vadd.f32 0.0, %v404
    %406 = vmatmul.bf16.gmra.mxu0 %v238
    %v407 = vpop.f32.mrf.mxu0
    %v408 = vadd.f32 0.0, %v407
    %v409 = vpop.f32.mrf.mxu0
    %v410 = vadd.f32 0.0, %v409
    %411 = vmatmul.bf16.gmra.mxu0 %v239
    %v412 = vpop.f32.mrf.mxu0
    %v413 = vadd.f32 0.0, %v412
    %v414 = vpop.f32.mrf.mxu0
    %v415 = vadd.f32 0.0, %v414
    %416 = vmatmul.bf16.gmra.mxu0 %v240
    %v417 = vpop.f32.mrf.mxu0
    %v418 = vadd.f32 0.0, %v417
    %v419 = vpop.f32.mrf.mxu0
    %v420 = vadd.f32 0.0, %v419
    %421 = vmatmul.bf16.gmra.mxu0 %v241
    %v422 = vpop.f32.mrf.mxu0
    %v423 = vadd.f32 0.0, %v422
    %v424 = vpop.f32.mrf.mxu0
    %v425 = vadd.f32 0.0, %v424
    %426 = vmatmul.bf16.gmra.mxu0 %v242
    %v427 = vpop.f32.mrf.mxu0
    %v428 = vadd.f32 0.0, %v427
    %v429 = vpop.f32.mrf.mxu0
    %v430 = vadd.f32 0.0, %v429
    %431 = vmatmul.bf16.gmra.mxu0 %v243
    %v432 = vpop.f32.mrf.mxu0
    %v433 = vadd.f32 0.0, %v432
    %v434 = vpop.f32.mrf.mxu0
    %v435 = vadd.f32 0.0, %v434
    %436 = vmatmul.bf16.gmra.mxu0 %v244
    %v437 = vpop.f32.mrf.mxu0
    %v438 = vadd.f32 0.0, %v437
    %v439 = vpop.f32.mrf.mxu0
    %v440 = vadd.f32 0.0, %v439
    %441 = vmatmul.bf16.gmra.mxu0 %v245
    %v442 = vpop.f32.mrf.mxu0
    %v443 = vadd.f32 0.0, %v442
    %v444 = vpop.f32.mrf.mxu0
    %v445 = vadd.f32 0.0, %v444
    %446 = vmatmul.bf16.gmra.mxu0 %v246
    %v447 = vpop.f32.mrf.mxu0
    %v448 = vadd.f32 0.0, %v447
    %v449 = vpop.f32.mrf.mxu0
    %v450 = vadd.f32 0.0, %v449
    %451 = vmatmul.bf16.gmra.mxu0 %v247
    %v452 = vpop.f32.mrf.mxu0
    %v453 = vadd.f32 0.0, %v452
    %v454 = vpop.f32.mrf.mxu0
    %v455 = vadd.f32 0.0, %v454
    %456 = vmatmul.bf16.gmra.mxu0 %v248
    %v457 = vpop.f32.mrf.mxu0
    %v458 = vadd.f32 0.0, %v457
    %v459 = vpop.f32.mrf.mxu0
    %v460 = vadd.f32 0.0, %v459
    %461 = vmatmul.bf16.gmra.mxu0 %v249
    %v462 = vpop.f32.mrf.mxu0
    %v463 = vadd.f32 0.0, %v462
    %v464 = vpop.f32.mrf.mxu0
    %v465 = vadd.f32 0.0, %v464
    %466 = vmatmul.bf16.gmra.mxu0 %v250
    %v467 = vpop.f32.mrf.mxu0
    %v468 = vadd.f32 0.0, %v467
    %v469 = vpop.f32.mrf.mxu0
    %v470 = vadd.f32 0.0, %v469
    %471 = vmatmul.bf16.gmra.mxu0 %v251
    %v472 = vpop.f32.mrf.mxu0
    %v473 = vadd.f32 0.0, %v472
    %v474 = vpop.f32.mrf.mxu0
    %v475 = vadd.f32 0.0, %v474
    %476 = vmatmul.bf16.gmra.mxu0 %v252
    %v477 = vpop.f32.mrf.mxu0
    %v478 = vadd.f32 0.0, %v477
    %v479 = vpop.f32.mrf.mxu0
    %v480 = vadd.f32 0.0, %v479
    %481 = vmatmul.bf16.gmra.mxu0 %v253
    %v482 = vpop.f32.mrf.mxu0
    %v483 = vadd.f32 0.0, %v482
    %v484 = vpop.f32.mrf.mxu0
    %v485 = vadd.f32 0.0, %v484
    %486 = vmatmul.bf16.gmra.mxu0 %v254
    %v487 = vpop.f32.mrf.mxu0
    %v488 = vadd.f32 0.0, %v487
    %v489 = vpop.f32.mrf.mxu0
    %v490 = vadd.f32 0.0, %v489
    %491 = vmatmul.bf16.gmra.mxu0 %v255
    %v492 = vpop.f32.mrf.mxu0
    %v493 = vadd.f32 0.0, %v492
    %v494 = vpop.f32.mrf.mxu0
    %v495 = vadd.f32 0.0, %v494
    %496 = vmatmul.bf16.gmra.mxu0 %v256
    %v497 = vpop.f32.mrf.mxu0
    %v498 = vadd.f32 0.0, %v497
    %v499 = vpop.f32.mrf.mxu0
    %v500 = vadd.f32 0.0, %v499
    %501 = vmatmul.bf16.gmra.mxu0 %v257
    %v502 = vpop.f32.mrf.mxu0
    %v503 = vadd.f32 0.0, %v502
    %v504 = vpop.f32.mrf.mxu0
    %v505 = vadd.f32 0.0, %v504
    %506 = vdwg.mxu0
    %v507 = vmax.f32 %v348, 0.0
    %v508 = vmax.f32 %v350, 0.0
    %v509 = vmax.f32 %v353, 0.0
    %v510 = vmax.f32 %v355, 0.0
    %v511 = vmax.f32 %v358, 0.0
    %v512 = vmax.f32 %v360, 0.0
    %v513 = vmax.f32 %v363, 0.0
    %v514 = vmax.f32 %v365, 0.0
    %v515 = vmax.f32 %v368, 0.0
    %v516 = vmax.f32 %v370, 0.0
    %v517 = vmax.f32 %v373, 0.0
    %v518 = vmax.f32 %v375, 0.0
    %v519 = vmax.f32 %v378, 0.0
    %v520 = vmax.f32 %v380, 0.0
    %v521 = vmax.f32 %v383, 0.0
    %v522 = vmax.f32 %v385, 0.0
    %v523 = vmax.f32 %v388, 0.0
    %v524 = vmax.f32 %v390, 0.0
    %v525 = vmax.f32 %v393, 0.0
    %v526 = vmax.f32 %v395, 0.0
    %v527 = vmax.f32 %v398, 0.0
    %v528 = vmax.f32 %v400, 0.0
    %v529 = vmax.f32 %v403, 0.0
    %v530 = vmax.f32 %v405, 0.0
    %v531 = vmax.f32 %v408, 0.0
    %v532 = vmax.f32 %v410, 0.0
    %v533 = vmax.f32 %v413, 0.0
    %v534 = vmax.f32 %v415, 0.0
    %v535 = vmax.f32 %v418, 0.0
    %v536 = vmax.f32 %v420, 0.0
    %v537 = vmax.f32 %v423, 0.0
    %v538 = vmax.f32 %v425, 0.0
    %v539 = vmax.f32 %v428, 0.0
    %v540 = vmax.f32 %v430, 0.0
    %v541 = vmax.f32 %v433, 0.0
    %v542 = vmax.f32 %v435, 0.0
    %v543 = vmax.f32 %v438, 0.0
    %v544 = vmax.f32 %v440, 0.0
    %v545 = vmax.f32 %v443, 0.0
    %v546 = vmax.f32 %v445, 0.0
    %v547 = vmax.f32 %v448, 0.0
    %v548 = vmax.f32 %v450, 0.0
    %v549 = vmax.f32 %v453, 0.0
    %v550 = vmax.f32 %v455, 0.0
    %v551 = vmax.f32 %v458, 0.0
    %v552 = vmax.f32 %v460, 0.0
    %v553 = vmax.f32 %v463, 0.0
    %v554 = vmax.f32 %v465, 0.0
    %v555 = vmax.f32 %v468, 0.0
    %v556 = vmax.f32 %v470, 0.0
    %v557 = vmax.f32 %v473, 0.0
    %v558 = vmax.f32 %v475, 0.0
    %v559 = vmax.f32 %v478, 0.0
    %v560 = vmax.f32 %v480, 0.0
    %v561 = vmax.f32 %v483, 0.0
    %v562 = vmax.f32 %v485, 0.0
    %v563 = vmax.f32 %v488, 0.0
    %v564 = vmax.f32 %v490, 0.0
    %v565 = vmax.f32 %v493, 0.0
    %v566 = vmax.f32 %v495, 0.0
    %v567 = vmax.f32 %v498, 0.0
    %v568 = vmax.f32 %v500, 0.0
    %v569 = vmax.f32 %v503, 0.0
    %v570 = vmax.f32 %v505, 0.0
    %v571 = vadd.f32 %v507, %v508
    %v572 = vadd.f32 %v571, %v509
    %v573 = vadd.f32 %v572, %v510
    %v574 = vadd.f32 %v573, %v511
    %v575 = vadd.f32 %v574, %v512
    %v576 = vadd.f32 %v575, %v513
    %v577 = vadd.f32 %v576, %v514
    %v578 = vadd.f32 %v577, %v515
    %v579 = vadd.f32 %v578, %v516
    %v580 = vadd.f32 %v579, %v517
    %v581 = vadd.f32 %v580, %v518
    %v582 = vadd.f32 %v581, %v519
    %v583 = vadd.f32 %v582, %v520
    %v584 = vadd.f32 %v583, %v521
    %v585 = vadd.f32 %v584, %v522
    %v586 = vadd.f32 %v585, %v523
    %v587 = vadd.f32 %v586, %v524
    %v588 = vadd.f32 %v587, %v525
    %v589 = vadd.f32 %v588, %v526
    %v590 = vadd.f32 %v589, %v527
    %v591 = vadd.f32 %v590, %v528
    %v592 = vadd.f32 %v591, %v529
    %v593 = vadd.f32 %v592, %v530
    %v594 = vadd.f32 %v593, %v531
    %v595 = vadd.f32 %v594, %v532
    %v596 = vadd.f32 %v595, %v533
    %v597 = vadd.f32 %v596, %v534
    %v598 = vadd.f32 %v597, %v535
    %v599 = vadd.f32 %v598, %v536
    %v600 = vadd.f32 %v599, %v537
    %v601 = vadd.f32 %v600, %v538
    %v602 = vrot.slane %v601, 4
    %v603 = vadd.f32 %v601, %v602
    %v604 = vrot.slane %v603, 2
    %v605 = vadd.f32 %v603, %v604
    %v606 = vrot.slane %v605, 1
    %v607 = vadd.f32 %v605, %v606
    %v608 = vadd.f32 %v539, %v540
    %v609 = vadd.f32 %v608, %v541
    %v610 = vadd.f32 %v609, %v542
    %v611 = vadd.f32 %v610, %v543
    %v612 = vadd.f32 %v611, %v544
    %v613 = vadd.f32 %v612, %v545
    %v614 = vadd.f32 %v613, %v546
    %v615 = vadd.f32 %v614, %v547
    %v616 = vadd.f32 %v615, %v548
    %v617 = vadd.f32 %v616, %v549
    %v618 = vadd.f32 %v617, %v550
    %v619 = vadd.f32 %v618, %v551
    %v620 = vadd.f32 %v619, %v552
    %v621 = vadd.f32 %v620, %v553
    %v622 = vadd.f32 %v621, %v554
    %v623 = vadd.f32 %v622, %v555
    %v624 = vadd.f32 %v623, %v556
    %v625 = vadd.f32 %v624, %v557
    %v626 = vadd.f32 %v625, %v558
    %v627 = vadd.f32 %v626, %v559
    %v628 = vadd.f32 %v627, %v560
    %v629 = vadd.f32 %v628, %v561
    %v630 = vadd.f32 %v629, %v562
    %v631 = vadd.f32 %v630, %v563
    %v632 = vadd.f32 %v631, %v564
    %v633 = vadd.f32 %v632, %v565
    %v634 = vadd.f32 %v633, %v566
    %v635 = vadd.f32 %v634, %v567
    %v636 = vadd.f32 %v635, %v568
    %v637 = vadd.f32 %v636, %v569
    %v638 = vadd.f32 %v637, %v570
    %v639 = vrot.slane %v638, 4
    %v640 = vadd.f32 %v638, %v639
    %v641 = vrot.slane %v640, 2
    %v642 = vadd.f32 %v640, %v641
    %v643 = vrot.slane %v642, 1
    %v644 = vadd.f32 %v642, %v643
    %v645 = vld [vmem:[%s2] sm:$0xff]
    %v646 = vld [vmem:[%s2 + $0x8] sm:$0xff]
    %v647 = vld [vmem:[%s2 + $0x10] sm:$0xff]
    %v648 = vld [vmem:[%s2 + $0x18] sm:$0xff]
    %v649 = vld [vmem:[%s2 + $0x20] sm:$0xff]
    %v650 = vld [vmem:[%s2 + $0x28] sm:$0xff]
    %v651 = vld [vmem:[%s2 + $0x30] sm:$0xff]
    %v652 = vld [vmem:[%s2 + $0x38] sm:$0xff]
    %v653 = vld [vmem:[%s2 + $0x40] sm:$0xff]
    %v654 = vld [vmem:[%s2 + $0x48] sm:$0xff]
    %v655 = vld [vmem:[%s2 + $0x50] sm:$0xff]
    %v656 = vld [vmem:[%s2 + $0x58] sm:$0xff]
    %v657 = vld [vmem:[%s2 + $0x60] sm:$0xff]
    %v658 = vld [vmem:[%s2 + $0x68] sm:$0xff]
    %v659 = vld [vmem:[%s2 + $0x70] sm:$0xff]
    %v660 = vld [vmem:[%s2 + $0x78] sm:$0xff]
    %v661 = vld [vmem:[%s3] sm:$0x1]
    %v663 = vperm.slane %v661, 0
    %vm667 = vcmask 1041409
    %v668 = vsel %vm667, %v644, %v607
    %670 = vmatpush.msra.mxu0 %v660
    %671 = vmatpush.msra.mxu0 %v659
    %672 = vmatpush.msra.mxu0 %v658
    %673 = vmatpush.msra.mxu0 %v657
    %674 = vmatpush.msra.mxu0 %v656
    %675 = vmatpush.msra.mxu0 %v655
    %676 = vmatpush.msra.mxu0 %v654
    %677 = vmatpush.msra.mxu0 %v653
    %678 = vmatpush.msra.mxu0 %v652
    %679 = vmatpush.msra.mxu0 %v651
    %680 = vmatpush.msra.mxu0 %v650
    %681 = vmatpush.msra.mxu0 %v649
    %682 = vmatpush.msra.mxu0 %v648
    %683 = vmatpush.msra.mxu0 %v647
    %684 = vmatpush.msra.mxu0 %v646
    %685 = vmatpush.msra.mxu0 %v645
    %686 = vmatmul.f32.gmra.mxu0 %v668
    %v687 = vpop.f32.mrf.mxu0
    %v688 = vadd.f32 %v663, %v687
    %689 = vdwg.mxu0
    %v691 = vrot.slane %v688, 1
    %693 = vst [vmem:[#allocation2] sm:$0x1] %v688
    %694 = vst [vmem:[#allocation2 + $0x1] sm:$0x1] %v691
    // Predicated region
    $region18: #{modified_densenet_forward.1} parent=1 // pred_check
      _
    $region19: #{modified_densenet_forward.1} parent=1 // pred_check_branch
      %696 = sbr.rel (0) target = $region21
    $region20: #{modified_densenet_forward.1} parent=1 // pred_region
      %698 = vsyncadd [#allocation3], 0
      %s699 = sshll.u32 [#allocation2], 4
      %s700 = int_to_ptr.vmem [resolvable:$true] %s699
      %s701 = sshll.u32 %s4, 4
      %s702 = int_to_ptr.hbm [resolvable:$true] %s701
      %707 = dma.vmem_to_hbm [thread:$0]  %s700, 32, %s702, [#allocation3], 16, 16, 1
    $region21: #{modified_densenet_forward.1} parent=1 // pred_fallthru
      _
    // Predicated region
    $region22: #{modified_densenet_forward.1} parent=1 // pred_check
      _
    $region23: #{modified_densenet_forward.1} parent=1 // pred_check_branch
      %709 = sbr.rel (0) target = $region25
    $region24: #{modified_densenet_forward.1} parent=1 // pred_region
      %711 = dma.done [#allocation3], 32
    $region25: #{modified_densenet_forward.1} parent=1 // pred_fallthru
      _
    %712 = vsyncpa [#allocation3], 1

</llo_original>
